<compile_context>
chip_gen: v5e
topology: v5e:2x2
jax: 0.10.0
libtpu: 0.0.40
codegen_flags: <defaults>
</compile_context>

<pallas_src>
import functools

import numpy as np
import jax
import jax.numpy as jnp
from jax.experimental import pallas as pl
from jax.experimental.pallas import tpu as pltpu

# ----------------------- small synthetic model config -----------------------
IN_HEAD = 32          # args['in_head'] : channels entering the detection heads
ANCHOR_NUM = 2        # args['anchor_number']
NUM_BINS = 2          # args['dir_args']['num_bins']
H = 16                # BEV height
W = 16                # BEV width
MAX_CAV = 5           # args['lidar_args']['max_cav']

CLS_C = ANCHOR_NUM
REG_C = 7 * ANCHOR_NUM
DIR_C = NUM_BINS * ANCHOR_NUM
IOU_C = ANCHOR_NUM
HEAD_OUT = CLS_C + REG_C + DIR_C + IOU_C   # fused (cls|reg|dir|iou) channels

HEAD_LIDAR, HEAD_CAMERA, HEAD_SHARED = 0, 1, 2


# ----------------------------- Pallas kernels -------------------------------
def _fused_heads_kernel(head_ids, x_ref, w_ref, b_ref, o_ref):
    """x: [Nf, C, HW], w: [3, O, C], b: [3, O, 1]  ->  o: [Nf, O, HW].

    `head_ids` is a static tuple (one entry per sample) selecting which head
    group's weights to use.  HW = 256 sits on lanes -> lane-dense stores.
    """
    for n, hid in enumerate(head_ids):           # Nf is small; unrolled
        o_ref[n] = (
            jnp.dot(w_ref[hid], x_ref[n], preferred_element_type=jnp.float32)
            + b_ref[hid]
        ).astype(o_ref.dtype)


def fused_heads_all(x_all, head_ids, w_all, b_all):
    """All detection heads for all samples in one Pallas launch.

    x_all   : [Nf, C, H, W] float32 (NCHW, untouched layout)
    head_ids: tuple of ints in {0,1,2} (lidar / camera / shared), len == Nf
    w_all   : [3, HEAD_OUT, C],  b_all: [3, HEAD_OUT, 1]
    Returns : [Nf, HEAD_OUT, H, W]  (NCHW, no transposes anywhere)
    """
    nf, c, h, w = x_all.shape
    hw = h * w
    o = w_all.shape[1]
    x_flat = x_all.reshape(nf, c, hw)            # contiguous view, free

    out = pl.pallas_call(
        functools.partial(_fused_heads_kernel, tuple(head_ids)),
        out_shape=jax.ShapeDtypeStruct((nf, o, hw), jnp.float32),
        grid_spec=pltpu.PrefetchScalarGridSpec(
            num_scalar_prefetch=0,
            grid=(1,),                           # whole problem is one block
            in_specs=[
                pl.BlockSpec((nf, c, hw), lambda i: (0, 0, 0)),
                pl.BlockSpec((3, o, c), lambda i: (0, 0, 0)),
                pl.BlockSpec((3, o, 1), lambda i: (0, 0, 0)),
            ],
            out_specs=pl.BlockSpec((nf, o, hw), lambda i: (0, 0, 0)),
        ),
        compiler_params=pltpu.CompilerParams(
            dimension_semantics=("arbitrary",)),
    )(x_flat, w_all, b_all)
    return out.reshape(nf, o, h, w)


def _roi_agg_kernel(lidar_ids, camera_ids, n_agents, max_cav,
                    win_ref, ego_ref, lid_ref, cam_ref):
    """win: [A, C, TP] packed ROI pixels -> ego/lidar/camera max maps [C, TP].

    Matches the reference: the ego feature maxes over agents AND the zero
    padding up to max_cav (F.pad(value=0) + .max(dim=0)); lidar/camera maxes
    only cover the corresponding agent subsets.
    """
    ego = win_ref[0]
    for a in range(1, n_agents):
        ego = jnp.maximum(ego, win_ref[a])
    if n_agents < max_cav:                       # zero-padded agents join max
        ego = jnp.maximum(ego, 0.0)
    ego_ref[...] = ego

    def subset_max(ids, out_r):
        if len(ids) == 0:
            out_r[...] = jnp.zeros_like(ego)
            return
        r = win_ref[ids[0]]
        for a in ids[1:]:
            r = jnp.maximum(r, win_ref[a])
        out_r[...] = r

    subset_max(tuple(lidar_ids), lid_ref)
    subset_max(tuple(camera_ids), cam_ref)


def roi_aggregate(heter_feats, roi_fused, lidar_ids, camera_ids):
    """Stage-2 per-proposal aggregation in one Pallas launch.

    heter_feats: [A, C, H, W];  roi_fused: list of (x0, x1, y0, y1) python ints
    Returns ego [C, sumP], lidar [C, sumP], camera [C, sumP], pixel counts.
    """
    a, c, h, w = heter_feats.shape

    # Static flattened spatial indices of every ROI pixel (y-major, like
    # flatten(start_dim=2) in the reference), packed in proposal order.
    idx_list, pix_counts = [], []
    for (x0, x1, y0, y1) in roi_fused:
        ys, xs = np.meshgrid(np.arange(y0, y1), np.arange(x0, x1), indexing="ij")
        idx_list.append((ys * w + xs).reshape(-1))
        pix_counts.append(int((y1 - y0) * (x1 - x0)))
    flat_idx = np.concatenate(idx_list).astype(np.int32)
    sum_p = int(flat_idx.shape[0])

    # Pad the packed pixel axis to a lane-dense multiple of 128 and pick a
    # pixel tile so VMEM stays bounded as the proposal count grows.
    p_pad = int(np.ceil(max(sum_p, 1) / 128) * 128)
    tp = min(p_pad, 1024)
    p_pad = int(np.ceil(p_pad / tp) * tp)
    flat_idx = np.pad(flat_idx, (0, p_pad - sum_p))   # pad with pixel 0 (discarded)

    # ONE gather packs every ROI window: [A, C, p_pad]
    packed = heter_feats.reshape(a, c, h * w)[:, :, jnp.asarray(flat_idx)]

    kernel = functools.partial(_roi_agg_kernel, tuple(lidar_ids),
                               tuple(camera_ids), a, MAX_CAV)
    out_spec = pl.BlockSpec((c, tp), lambda j: (0, j))
    out_sd = jax.ShapeDtypeStruct((c, p_pad), jnp.float32)

    ego, lid, cam = pl.pallas_call(
        kernel,
        out_shape=(out_sd, out_sd, out_sd),
        grid_spec=pltpu.PrefetchScalarGridSpec(
            num_scalar_prefetch=0,
            grid=(p_pad // tp,),
            in_specs=[pl.BlockSpec((a, c, tp), lambda j: (0, 0, j))],
            out_specs=(out_spec, out_spec, out_spec),
        ),
        compiler_params=pltpu.CompilerParams(
            dimension_semantics=("arbitrary",)),
    )(packed)
    return ego[:, :sum_p], lid[:, :sum_p], cam[:, :sum_p], pix_counts


# ------------------------- deterministic parameters --------------------------
def make_head_group(key, c_in):
    """[O, C] weights and [O, 1] bias for one (cls, reg, dir, iou) head group."""
    ks = jax.random.split(key, 7)
    wt = jnp.concatenate([
        0.02 * jax.random.normal(ks[0], (CLS_C, c_in)),
        0.02 * jax.random.normal(ks[1], (REG_C, c_in)),
        0.02 * jax.random.normal(ks[2], (DIR_C, c_in)),
        0.02 * jax.random.normal(ks[3], (IOU_C, c_in)),
    ], axis=0).astype(jnp.float32)
    b = jnp.concatenate([
        0.02 * jax.random.normal(ks[4], (CLS_C,)),
        0.02 * jax.random.normal(ks[5], (REG_C,)),
        0.02 * jax.random.normal(ks[6], (DIR_C,)),
        jnp.zeros((IOU_C,)),                          # iou head: bias=False
    ]).astype(jnp.float32)[:, None]
    return wt, b


def init_params(key):
    k_l, k_c, k_s = jax.random.split(key, 3)
    wl, bl = make_head_group(k_l, IN_HEAD)
    wc, bc = make_head_group(k_c, IN_HEAD)
    ws, bs = make_head_group(k_s, IN_HEAD)
    return {"heads_w": jnp.stack([wl, wc, ws]),       # [3, O, C]
            "heads_b": jnp.stack([bl, bc, bs])}       # [3, O, 1]


# ------------------------------- forward pass --------------------------------
def heter_second_forward(params, lidar_feats, camera_feats,
                         lidar_agent_indicator, record_len,
                         roi_fused, train_stage2=True):
    """Compute-relevant part of HeterSECONDLiftSplat2Stage.forward.

    lidar_feats  : [N_lidar,  C, H, W]  (post-encoder/shrink BEV features)
    camera_feats : [N_camera, C, H, W]
    lidar_agent_indicator : python list of 0/1, len == sum(record_len)
    roi_fused    : list of (x0, x1, y0, y1) python-int ROIs (stage-2 proposals)
    """
    batch_dict = {}
    skip_camera = sum(lidar_agent_indicator) == sum(record_len)
    skip_lidar = sum(lidar_agent_indicator) == 0

    w_all, b_all = params["heads_w"], params["heads_b"]

    # TODO(synk): lidar_encoder (VFE/spconv/SSFA), camera_encoder
    # (LiftSplatShoot), shrink heads and AlignNet/DeformAlignNet are identity
    # here; the synthetic BEV features stand in for their outputs.
    n_l = 0 if skip_lidar else lidar_feats.shape[0]
    n_c = 0 if skip_camera else camera_feats.shape[0]

    # ---- heterogeneous stacking by agent modality (same ordering as ref) ----
    order = []
    if skip_camera:
        heter_feature_2d = lidar_feats
        order = [("l", i) for i in range(n_l)]
    elif skip_lidar:
        heter_feature_2d = camera_feats
        order = [("c", i) for i in range(n_c)]
    else:
        hl, li, ci = [], 0, 0
        for ind in lidar_agent_indicator:
            if ind:
                hl.append(lidar_feats[li]); order.append(("l", li)); li += 1
            else:
                hl.append(camera_feats[ci]); order.append(("c", ci)); ci += 1
        heter_feature_2d = jnp.stack(hl)
    n_tot = heter_feature_2d.shape[0]

    # ---- ALL 1x1-conv heads in ONE Pallas launch (lane-dense, one block) ----
    parts, head_ids = [], []
    if n_l:
        parts.append(lidar_feats);  head_ids += [HEAD_LIDAR] * n_l
    if n_c:
        parts.append(camera_feats); head_ids += [HEAD_CAMERA] * n_c
    parts.append(heter_feature_2d); head_ids += [HEAD_SHARED] * n_tot
    x_all = jnp.concatenate(parts, axis=0) if len(parts) > 1 else parts[0]
    out_all = fused_heads_all(x_all, head_ids, w_all, b_all)  # [Nf, O, H, W]

    out_l = out_all[:n_l]
    out_c = out_all[n_l:n_l + n_c]
    out_s = out_all[n_l + n_c:]

    def split_heads(o):
        return (o[:, :CLS_C],
                o[:, CLS_C:CLS_C + REG_C],
                o[:, CLS_C + REG_C:CLS_C + REG_C + DIR_C],
                o[:, CLS_C + REG_C + DIR_C:])

    cls_l, reg_l, dir_l, _iou_l = split_heads(out_l)
    cls_c, reg_c, dir_c, _iou_c = split_heads(out_c)
    cls_s, reg_s, dir_s, _iou_s = split_heads(out_s)

    # ---- stage1 per-agent outputs (iou heads computed but, as in the
    #      reference, not placed into stage1_out) ----
    if skip_camera:
        stage1 = {"cls_preds": cls_l, "reg_preds": reg_l, "dir_preds": dir_l}
    elif skip_lidar:
        stage1 = {"cls_preds": cls_c, "reg_preds": reg_c, "dir_preds": dir_c}
    else:
        cl, rl, dl = [], [], []
        for mod, idx in order:
            src = (cls_l, reg_l, dir_l) if mod == "l" else (cls_c, reg_c, dir_c)
            cl.append(src[0][idx]); rl.append(src[1][idx]); dl.append(src[2][idx])
        stage1 = {"cls_preds": jnp.stack(cl), "reg_preds": jnp.stack(rl),
                  "dir_preds": jnp.stack(dl)}
    batch_dict["stage1_out"] = stage1
    batch_dict["shared_head_out"] = {"cls_preds": cls_s, "reg_preds": reg_s,
                                     "dir_preds": dir_s}

    # TODO(synk): FpvrcnnPostprocessor.post_process (NMS / box decode) is
    # data-dependent control flow with no Pallas equivalent; synthetic ROIs are
    # passed in through `roi_fused` instead.
    batch_dict["det_boxes"] = roi_fused
    batch_dict["det_scores"] = None

    if train_stage2 and len(roi_fused) > 0:
        # TODO(synk): normalize_pairwise_tfm + warp_feature, MatcherV3,
        # ViewEmbedding and BEVRoIHead are identity / not reproduced; every
        # proposal sees all agents (uniform modality matrices), as in v1.
        lidar_ids = [a for a, ind in enumerate(lidar_agent_indicator) if ind]
        camera_ids = [a for a, ind in enumerate(lidar_agent_indicator) if not ind]

        ego_cp, lid_cp, cam_cp, pix_counts = roi_aggregate(
            heter_feature_2d, roi_fused, lidar_ids, camera_ids)

        # reference layout: [sum(RoI pixels), C], split per proposal
        feature_of_proposals_ego = ego_cp.T
        splits = np.cumsum(pix_counts)[:-1].tolist()
        batch_dict["feature_of_proposals_ego_list"] = jnp.split(
            feature_of_proposals_ego, splits, axis=0)
        batch_dict["batch_size_2stage"] = len(record_len)

        if len(lidar_ids) != 0 and len(camera_ids) != 0:
            batch_dict["kd_items"] = {
                "lidar_roi_features": lid_cp,     # [C, sum(RoI pixels)]
                "camera_roi_features": cam_cp,
            }
    return batch_dict


# ------------------------------------ main ------------------------------------
if __name__ == "__main__":
    key = jax.random.PRNGKey(0)
    k_p, k_l, k_c = jax.random.split(key, 3)

    params = init_params(k_p)

    # one lidar agent + one camera agent, one scene
    lidar_agent_indicator = [1, 0]
    record_len = [2]
    lidar_feats = jax.random.normal(k_l, (1, IN_HEAD, H, W), jnp.float32)
    camera_feats = jax.random.normal(k_c, (1, IN_HEAD, H, W), jnp.float32)

    # two synthetic stage-1 proposals (x0, x1, y0, y1), each 4x4
    roi_fused = [(2, 6, 3, 7), (8, 12, 0, 4)]

    out = heter_second_forward(params, lidar_feats, camera_feats,
                               lidar_agent_indicator, record_len, roi_fused,
                               train_stage2=True)

    jax.block_until_ready(out["shared_head_out"]["cls_preds"])
    jax.block_until_ready(out["stage1_out"]["reg_preds"])
    jax.block_until_ready(out["feature_of_proposals_ego_list"][0])
    jax.block_until_ready(out["kd_items"]["lidar_roi_features"])

    # light shape sanity checks
    assert out["shared_head_out"]["cls_preds"].shape == (2, ANCHOR_NUM, H, W)
    assert out["shared_head_out"]["reg_preds"].shape == (2, 7 * ANCHOR_NUM, H, W)
    assert out["shared_head_out"]["dir_preds"].shape == (2, NUM_BINS * ANCHOR_NUM, H, W)
    assert out["stage1_out"]["cls_preds"].shape == (2, ANCHOR_NUM, H, W)
    assert out["feature_of_proposals_ego_list"][0].shape == (16, IN_HEAD)
    assert out["kd_items"]["lidar_roi_features"].shape == (IN_HEAD, 32)

    print("KERNEL_OK")
</pallas_src>

<mosaic_0001>
module attributes {stable_mosaic.version = 11 : i64} {
  func.func @_fused_heads_kernel(%arg0: i32, %arg1: memref<4x32x256xf32, #tpu.memory_space<vmem>>, %arg2: memref<3x22x32xf32, #tpu.memory_space<vmem>>, %arg3: memref<3x22x1xf32, #tpu.memory_space<vmem>>, %arg4: memref<4x22x256xf32, #tpu.memory_space<vmem>>) attributes {dimension_semantics = [#tpu.dimension_semantics<arbitrary>], iteration_bounds = array<i64: 1>, scalar_prefetch = 0 : i64, scratch_operands = 0 : i64, tpu.core_type = #tpu.core_type<tc>, window_params = [{pipeline_mode = #tpu.pipeline_mode<synchronous>, transform_indices = @transform_0, window_bounds = array<i64: 4, 32, 256>}, {pipeline_mode = #tpu.pipeline_mode<synchronous>, transform_indices = @transform_1, window_bounds = array<i64: 3, 22, 32>}, {pipeline_mode = #tpu.pipeline_mode<synchronous>, transform_indices = @transform_2, window_bounds = array<i64: 3, 22, 1>}, {pipeline_mode = #tpu.pipeline_mode<synchronous>, transform_indices = @transform_3, window_bounds = array<i64: 4, 22, 256>}]} {
    %c0 = arith.constant 0 : index
    %c0_0 = arith.constant 0 : index
    %c0_1 = arith.constant 0 : index
    %0 = vector.load %arg2[%c0, %c0_0, %c0_1] : memref<3x22x32xf32, #tpu.memory_space<vmem>>, vector<1x22x32xf32>
    %1 = vector.shape_cast %0 : vector<1x22x32xf32> to vector<22x32xf32>
    %c0_2 = arith.constant 0 : index
    %c0_3 = arith.constant 0 : index
    %c0_4 = arith.constant 0 : index
    %2 = vector.load %arg1[%c0_2, %c0_3, %c0_4] : memref<4x32x256xf32, #tpu.memory_space<vmem>>, vector<1x32x256xf32>
    %3 = vector.shape_cast %2 : vector<1x32x256xf32> to vector<32x256xf32>
    %cst = arith.constant dense<0.000000e+00> : vector<22x256xf32>
    %4 = tpu.matmul %1, %3, %cst {dimension_numbers = #tpu.dot_dimension_numbers<[1], [0], [0], [1], [0, 0, 1, 1], [], []>} : vector<22x32xf32>, vector<32x256xf32>, vector<22x256xf32> -> vector<22x256xf32>
    %c0_5 = arith.constant 0 : index
    %c0_6 = arith.constant 0 : index
    %c0_7 = arith.constant 0 : index
    %5 = vector.load %arg3[%c0_5, %c0_6, %c0_7] : memref<3x22x1xf32, #tpu.memory_space<vmem>>, vector<1x22x1xf32>
    %6 = vector.shape_cast %5 : vector<1x22x1xf32> to vector<22x1xf32>
    %7 = vector.broadcast %6 : vector<22x1xf32> to vector<22x256xf32>
    %8 = arith.addf %4, %7 : vector<22x256xf32>
    %c0_8 = arith.constant 0 : index
    %c0_9 = arith.constant 0 : index
    %c0_10 = arith.constant 0 : index
    %9 = vector.load %arg4[%c0_8, %c0_9, %c0_10] : memref<4x22x256xf32, #tpu.memory_space<vmem>>, vector<1x22x256xf32>
    %10 = vector.shape_cast %9 : vector<1x22x256xf32> to vector<22x256xf32>
    %11 = vector.shape_cast %8 : vector<22x256xf32> to vector<1x22x256xf32>
    tpu.vector_store %arg4[%c0_8, %c0_9, %c0_10], %11 {strides = array<i32>} : memref<4x22x256xf32, #tpu.memory_space<vmem>>, vector<1x22x256xf32>,
    %c1 = arith.constant 1 : index
    %c0_11 = arith.constant 0 : index
    %c0_12 = arith.constant 0 : index
    %12 = vector.load %arg2[%c1, %c0_11, %c0_12] : memref<3x22x32xf32, #tpu.memory_space<vmem>>, vector<1x22x32xf32>
    %13 = vector.shape_cast %12 : vector<1x22x32xf32> to vector<22x32xf32>
    %c1_13 = arith.constant 1 : index
    %c0_14 = arith.constant 0 : index
    %c0_15 = arith.constant 0 : index
    %14 = vector.load %arg1[%c1_13, %c0_14, %c0_15] : memref<4x32x256xf32, #tpu.memory_space<vmem>>, vector<1x32x256xf32>
    %15 = vector.shape_cast %14 : vector<1x32x256xf32> to vector<32x256xf32>
    %cst_16 = arith.constant dense<0.000000e+00> : vector<22x256xf32>
    %16 = tpu.matmul %13, %15, %cst_16 {dimension_numbers = #tpu.dot_dimension_numbers<[1], [0], [0], [1], [0, 0, 1, 1], [], []>} : vector<22x32xf32>, vector<32x256xf32>, vector<22x256xf32> -> vector<22x256xf32>
    %c1_17 = arith.constant 1 : index
    %c0_18 = arith.constant 0 : index
    %c0_19 = arith.constant 0 : index
    %17 = vector.load %arg3[%c1_17, %c0_18, %c0_19] : memref<3x22x1xf32, #tpu.memory_space<vmem>>, vector<1x22x1xf32>
    %18 = vector.shape_cast %17 : vector<1x22x1xf32> to vector<22x1xf32>
    %19 = vector.broadcast %18 : vector<22x1xf32> to vector<22x256xf32>
    %20 = arith.addf %16, %19 : vector<22x256xf32>
    %c1_20 = arith.constant 1 : index
    %c0_21 = arith.constant 0 : index
    %c0_22 = arith.constant 0 : index
    %21 = vector.load %arg4[%c1_20, %c0_21, %c0_22] : memref<4x22x256xf32, #tpu.memory_space<vmem>>, vector<1x22x256xf32>
    %22 = vector.shape_cast %21 : vector<1x22x256xf32> to vector<22x256xf32>
    %23 = vector.shape_cast %20 : vector<22x256xf32> to vector<1x22x256xf32>
    tpu.vector_store %arg4[%c1_20, %c0_21, %c0_22], %23 {strides = array<i32>} : memref<4x22x256xf32, #tpu.memory_space<vmem>>, vector<1x22x256xf32>,
    %c2 = arith.constant 2 : index
    %c0_23 = arith.constant 0 : index
    %c0_24 = arith.constant 0 : index
    %24 = vector.load %arg2[%c2, %c0_23, %c0_24] : memref<3x22x32xf32, #tpu.memory_space<vmem>>, vector<1x22x32xf32>
    %25 = vector.shape_cast %24 : vector<1x22x32xf32> to vector<22x32xf32>
    %c2_25 = arith.constant 2 : index
    %c0_26 = arith.constant 0 : index
    %c0_27 = arith.constant 0 : index
    %26 = vector.load %arg1[%c2_25, %c0_26, %c0_27] : memref<4x32x256xf32, #tpu.memory_space<vmem>>, vector<1x32x256xf32>
    %27 = vector.shape_cast %26 : vector<1x32x256xf32> to vector<32x256xf32>
    %cst_28 = arith.constant dense<0.000000e+00> : vector<22x256xf32>
    %28 = tpu.matmul %25, %27, %cst_28 {dimension_numbers = #tpu.dot_dimension_numbers<[1], [0], [0], [1], [0, 0, 1, 1], [], []>} : vector<22x32xf32>, vector<32x256xf32>, vector<22x256xf32> -> vector<22x256xf32>
    %c2_29 = arith.constant 2 : index
    %c0_30 = arith.constant 0 : index
    %c0_31 = arith.constant 0 : index
    %29 = vector.load %arg3[%c2_29, %c0_30, %c0_31] : memref<3x22x1xf32, #tpu.memory_space<vmem>>, vector<1x22x1xf32>
    %30 = vector.shape_cast %29 : vector<1x22x1xf32> to vector<22x1xf32>
    %31 = vector.broadcast %30 : vector<22x1xf32> to vector<22x256xf32>
    %32 = arith.addf %28, %31 : vector<22x256xf32>
    %c2_32 = arith.constant 2 : index
    %c0_33 = arith.constant 0 : index
    %c0_34 = arith.constant 0 : index
    %33 = vector.load %arg4[%c2_32, %c0_33, %c0_34] : memref<4x22x256xf32, #tpu.memory_space<vmem>>, vector<1x22x256xf32>
    %34 = vector.shape_cast %33 : vector<1x22x256xf32> to vector<22x256xf32>
    %35 = vector.shape_cast %32 : vector<22x256xf32> to vector<1x22x256xf32>
    tpu.vector_store %arg4[%c2_32, %c0_33, %c0_34], %35 {strides = array<i32>} : memref<4x22x256xf32, #tpu.memory_space<vmem>>, vector<1x22x256xf32>,
    %c2_35 = arith.constant 2 : index
    %c0_36 = arith.constant 0 : index
    %c0_37 = arith.constant 0 : index
    %36 = vector.load %arg2[%c2_35, %c0_36, %c0_37] : memref<3x22x32xf32, #tpu.memory_space<vmem>>, vector<1x22x32xf32>
    %37 = vector.shape_cast %36 : vector<1x22x32xf32> to vector<22x32xf32>
    %c3 = arith.constant 3 : index
    %c0_38 = arith.constant 0 : index
    %c0_39 = arith.constant 0 : index
    %38 = vector.load %arg1[%c3, %c0_38, %c0_39] : memref<4x32x256xf32, #tpu.memory_space<vmem>>, vector<1x32x256xf32>
    %39 = vector.shape_cast %38 : vector<1x32x256xf32> to vector<32x256xf32>
    %cst_40 = arith.constant dense<0.000000e+00> : vector<22x256xf32>
    %40 = tpu.matmul %37, %39, %cst_40 {dimension_numbers = #tpu.dot_dimension_numbers<[1], [0], [0], [1], [0, 0, 1, 1], [], []>} : vector<22x32xf32>, vector<32x256xf32>, vector<22x256xf32> -> vector<22x256xf32>
    %c2_41 = arith.constant 2 : index
    %c0_42 = arith.constant 0 : index
    %c0_43 = arith.constant 0 : index
    %41 = vector.load %arg3[%c2_41, %c0_42, %c0_43] : memref<3x22x1xf32, #tpu.memory_space<vmem>>, vector<1x22x1xf32>
    %42 = vector.shape_cast %41 : vector<1x22x1xf32> to vector<22x1xf32>
    %43 = vector.broadcast %42 : vector<22x1xf32> to vector<22x256xf32>
    %44 = arith.addf %40, %43 : vector<22x256xf32>
    %c3_44 = arith.constant 3 : index
    %c0_45 = arith.constant 0 : index
    %c0_46 = arith.constant 0 : index
    %45 = vector.load %arg4[%c3_44, %c0_45, %c0_46] : memref<4x22x256xf32, #tpu.memory_space<vmem>>, vector<1x22x256xf32>
    %46 = vector.shape_cast %45 : vector<1x22x256xf32> to vector<22x256xf32>
    %47 = vector.shape_cast %44 : vector<22x256xf32> to vector<1x22x256xf32>
    tpu.vector_store %arg4[%c3_44, %c0_45, %c0_46], %47 {strides = array<i32>} : memref<4x22x256xf32, #tpu.memory_space<vmem>>, vector<1x22x256xf32>,
    return
  }
  func.func @transform_0(%arg0: i32) -> (i32, i32, i32) {
    %c0_i32 = arith.constant 0 : i32
    %c0_i32_0 = arith.constant 0 : i32
    %c0_i32_1 = arith.constant 0 : i32
    %c0_i32_2 = arith.constant 0 : i32
    return %c0_i32, %c0_i32_0, %c0_i32_1 : i32, i32, i32
  }
  func.func @transform_1(%arg0: i32) -> (i32, i32, i32) {
    %c0_i32 = arith.constant 0 : i32
    %c0_i32_0 = arith.constant 0 : i32
    %c0_i32_1 = arith.constant 0 : i32
    %c0_i32_2 = arith.constant 0 : i32
    return %c0_i32, %c0_i32_0, %c0_i32_1 : i32, i32, i32
  }
  func.func @transform_2(%arg0: i32) -> (i32, i32, i32) {
    %c0_i32 = arith.constant 0 : i32
    %c0_i32_0 = arith.constant 0 : i32
    %c0_i32_1 = arith.constant 0 : i32
    %c0_i32_2 = arith.constant 0 : i32
    return %c0_i32, %c0_i32_0, %c0_i32_1 : i32, i32, i32
  }
  func.func @transform_3(%arg0: i32) -> (i32, i32, i32) {
    %c0_i32 = arith.constant 0 : i32
    %c0_i32_0 = arith.constant 0 : i32
    %c0_i32_1 = arith.constant 0 : i32
    %c0_i32_2 = arith.constant 0 : i32
    return %c0_i32, %c0_i32_0, %c0_i32_1 : i32, i32, i32
  }
}

</mosaic_0001>

<llo_original>
// kernel: tpu_custom_call.1
$region0: #{tpu_custom_call.1}
  #allocation0 [shape = 'u32[]', space=smem, size = 0x4, offset = 0x4, fixed_abs, tag = 'smem constant byte address 0x4 - core index']
  #allocation1 [shape = 'u32[72,128]{1,0:T(1,128)}', space=vmem, size = 0x9000, scoped, tag = 'internal scratch']
  %s0 = inlined_call_operand.hbm [shape: f32[4,32,256], index: 0, kind: input, shape index: {}]
  %s1 = inlined_call_operand.vmem [shape: f32[3,22,32], index: 1, kind: input, shape index: {}]
  %s2 = inlined_call_operand.vmem [shape: f32[3,22,1], index: 2, kind: input, shape index: {}]
  %s3 = inlined_call_operand.vmem [shape: f32[4,22,256], index: 3, kind: output, shape index: {}]
  %s4 = sld [smem:[#allocation0]]
  $region26: #{tpu_custom_call.1} parent=0
    _
  %s6 = ssub.s32 1, %s4
  %s7 = scalar_select 0, %s6, %s4
  $region1: #{tpu_custom_call.1} parent=0
    #allocation2 [shape = 'u8[131072]{0}', space=vmem, size = 0x20000, scoped, tag = 'input window, operand 0, single buffered']
    #allocation3 [shape = 's32[1]{0}', space=sflag, size = 0x4, scoped, tag = 'scoped memory for tpu_custom_call.1']
    %8 = vsyncpa [#allocation3], 0
    // Predicated region
    $region2: #{tpu_custom_call.1} parent=1 // pred_check
      _
    $region3: #{tpu_custom_call.1} parent=1 // pred_check_branch
      %10 = sbr.rel (0) target = $region5
    $region4: #{tpu_custom_call.1} parent=1 // pred_region
      %12 = vsyncadd [#allocation3], 0
      %s13 = sshll.u32 %s0, 4
      %s14 = int_to_ptr.hbm [resolvable:$true] %s13
      %s15 = sshll.u32 [#allocation2], 4
      %s16 = int_to_ptr.vmem [resolvable:$true] %s15
      %21 = dma.hbm_to_vmem [thread:$0]  %s14, 4096, %s16, [#allocation3], 256, 256, 16
    $region5: #{tpu_custom_call.1} parent=1 // pred_fallthru
      _
    // Predicated region
    $region6: #{tpu_custom_call.1} parent=1 // pred_check
      _
    $region7: #{tpu_custom_call.1} parent=1 // pred_check_branch
      %23 = sbr.rel (0) target = $region9
    $region8: #{tpu_custom_call.1} parent=1 // pred_region
      _
    $region9: #{tpu_custom_call.1} parent=1 // pred_fallthru
      _
    // Predicated region
    $region10: #{tpu_custom_call.1} parent=1 // pred_check
      _
    $region11: #{tpu_custom_call.1} parent=1 // pred_check_branch
      %25 = sbr.rel (0) target = $region13
    $region12: #{tpu_custom_call.1} parent=1 // pred_region
      _
    $region13: #{tpu_custom_call.1} parent=1 // pred_fallthru
      _
    // Predicated region
    $region14: #{tpu_custom_call.1} parent=1 // pred_check
      _
    $region15: #{tpu_custom_call.1} parent=1 // pred_check_branch
      %27 = sbr.rel (0) target = $region17
    $region16: #{tpu_custom_call.1} parent=1 // pred_region
      %29 = dma.done [#allocation3], 4096
    $region17: #{tpu_custom_call.1} parent=1 // pred_fallthru
      _
    %v30 = vld [vmem:[%s1] sm:$0xff]
    %v31 = vld [vmem:[%s1 + $0x8] sm:$0xff]
    %v32 = vld [vmem:[%s1 + $0x10] sm:$0x3f]
    %v33 = vld [vmem:[#allocation2] sm:$0xff]
    %v34 = vld [vmem:[#allocation2 + $0x8] sm:$0xff]
    %v35 = vld [vmem:[#allocation2 + $0x10] sm:$0xff]
    %v36 = vld [vmem:[#allocation2 + $0x18] sm:$0xff]
    %v37 = vld [vmem:[#allocation2 + $0x20] sm:$0xff]
    %v38 = vld [vmem:[#allocation2 + $0x28] sm:$0xff]
    %v39 = vld [vmem:[#allocation2 + $0x30] sm:$0xff]
    %v40 = vld [vmem:[#allocation2 + $0x38] sm:$0xff]
    %v41 = vld [vmem:[%s2] sm:$0xff]
    %v42 = vld [vmem:[%s2 + $0x8] sm:$0xff]
    %v43 = vld [vmem:[%s2 + $0x10] sm:$0x3f]
    %45 = vset.pattern.permute.xlu0 0
    %46 = vperm.xlu0 %45, %v41
    %v47 = vpop.permute.xlu0 %46
    %50 = vset.pattern.permute.xlu0 0
    %51 = vperm.xlu0 %50, %v42
    %v52 = vpop.permute.xlu0 %51
    %55 = vset.pattern.permute.xlu0 0
    %56 = vperm.xlu0 %55, %v43
    %v57 = vpop.permute.xlu0 %56
    %vm59 = vcmask 261120
    %v61 = vsel %vm59, %v30, 0
    %v64 = vsel %vm59, %v31, 0
    %v67 = vsel %vm59, %v32, 0
    %69 = vmatpush.msra.mxu0 0.0
    %70 = vmatpush.msra.mxu0 0.0
    %71 = vmatpush.msra.mxu0 0.0
    %72 = vmatpush.msra.mxu0 0.0
    %73 = vmatpush.msra.mxu0 0.0
    %74 = vmatpush.msra.mxu0 0.0
    %75 = vmatpush.msra.mxu0 0.0
    %76 = vmatpush.msra.mxu0 0.0
    %77 = vmatpush.msra.mxu0 0.0
    %78 = vmatpush.msra.mxu0 0.0
    %79 = vmatpush.msra.mxu0 0.0
    %80 = vmatpush.msra.mxu0 0.0
    %81 = vmatpush.msra.mxu0 %v39
    %82 = vmatpush.msra.mxu0 %v37
    %83 = vmatpush.msra.mxu0 %v35
    %84 = vmatpush.msra.mxu0 %v33
    %85 = vmatmul.f32.gmra.mxu0 %v61
    %v86 = vpop.f32.mrf.mxu0
    %v87 = vadd.f32 %v47, %v86
    %88 = vmatmul.f32.gmra.mxu0 %v64
    %v89 = vpop.f32.mrf.mxu0
    %v90 = vadd.f32 %v52, %v89
    %91 = vmatmul.f32.gmra.mxu0 %v67
    %v92 = vpop.f32.mrf.mxu0
    %v93 = vadd.f32 %v57, %v92
    %94 = vdwg.mxu0
    %95 = vmatpush.msra.mxu0 0.0
    %96 = vmatpush.msra.mxu0 0.0
    %97 = vmatpush.msra.mxu0 0.0
    %98 = vmatpush.msra.mxu0 0.0
    %99 = vmatpush.msra.mxu0 0.0
    %100 = vmatpush.msra.mxu0 0.0
    %101 = vmatpush.msra.mxu0 0.0
    %102 = vmatpush.msra.mxu0 0.0
    %103 = vmatpush.msra.mxu0 0.0
    %104 = vmatpush.msra.mxu0 0.0
    %105 = vmatpush.msra.mxu0 0.0
    %106 = vmatpush.msra.mxu0 0.0
    %107 = vmatpush.msra.mxu0 %v40
    %108 = vmatpush.msra.mxu0 %v38
    %109 = vmatpush.msra.mxu0 %v36
    %110 = vmatpush.msra.mxu0 %v34
    %111 = vmatmul.f32.gmra.mxu0 %v61
    %v112 = vpop.f32.mrf.mxu0
    %v113 = vadd.f32 %v47, %v112
    %114 = vmatmul.f32.gmra.mxu0 %v64
    %v115 = vpop.f32.mrf.mxu0
    %v116 = vadd.f32 %v52, %v115
    %117 = vmatmul.f32.gmra.mxu0 %v67
    %v118 = vpop.f32.mrf.mxu0
    %v119 = vadd.f32 %v57, %v118
    %120 = vdwg.mxu0
    %121 = vst [vmem:[%s3] sm:$0xff] %v87
    %122 = vst [vmem:[%s3 + $0x8] sm:$0xff] %v113
    %123 = vst [vmem:[%s3 + $0x10] sm:$0xff] %v90
    %124 = vst [vmem:[%s3 + $0x18] sm:$0xff] %v116
    %125 = vst [vmem:[%s3 + $0x20] sm:$0x3f] %v93
    %126 = vst [vmem:[%s3 + $0x28] sm:$0x3f] %v119
    %s127 = scalar_lea.vmem %s1, 24
    %v128 = vld [vmem:[%s127] sm:$0xff]
    %v129 = vld [vmem:[%s127 + $0x8] sm:$0xff]
    %v130 = vld [vmem:[%s127 + $0x10] sm:$0x3f]
    %s131 = scalar_lea.vmem [#allocation2], 64
    %v132 = vld [vmem:[%s131] sm:$0xff]
    %v133 = vld [vmem:[%s131 + $0x8] sm:$0xff]
    %v134 = vld [vmem:[%s131 + $0x10] sm:$0xff]
    %v135 = vld [vmem:[%s131 + $0x18] sm:$0xff]
    %v136 = vld [vmem:[%s131 + $0x20] sm:$0xff]
    %v137 = vld [vmem:[%s131 + $0x28] sm:$0xff]
    %v138 = vld [vmem:[%s131 + $0x30] sm:$0xff]
    %v139 = vld [vmem:[%s131 + $0x38] sm:$0xff]
    %s140 = scalar_lea.vmem %s2, 24
    %v141 = vld [vmem:[%s140] sm:$0xff]
    %v142 = vld [vmem:[%s140 + $0x8] sm:$0xff]
    %v143 = vld [vmem:[%s140 + $0x10] sm:$0x3f]
    %145 = vset.pattern.permute.xlu0 0
    %146 = vperm.xlu0 %145, %v141
    %v147 = vpop.permute.xlu0 %146
    %150 = vset.pattern.permute.xlu0 0
    %151 = vperm.xlu0 %150, %v142
    %v152 = vpop.permute.xlu0 %151
    %155 = vset.pattern.permute.xlu0 0
    %156 = vperm.xlu0 %155, %v143
    %v157 = vpop.permute.xlu0 %156
    %v160 = vsel %vm59, %v128, 0
    %v163 = vsel %vm59, %v129, 0
    %v166 = vsel %vm59, %v130, 0
    %168 = vmatpush.msra.mxu0 0.0
    %169 = vmatpush.msra.mxu0 0.0
    %170 = vmatpush.msra.mxu0 0.0
    %171 = vmatpush.msra.mxu0 0.0
    %172 = vmatpush.msra.mxu0 0.0
    %173 = vmatpush.msra.mxu0 0.0
    %174 = vmatpush.msra.mxu0 0.0
    %175 = vmatpush.msra.mxu0 0.0
    %176 = vmatpush.msra.mxu0 0.0
    %177 = vmatpush.msra.mxu0 0.0
    %178 = vmatpush.msra.mxu0 0.0
    %179 = vmatpush.msra.mxu0 0.0
    %180 = vmatpush.msra.mxu0 %v138
    %181 = vmatpush.msra.mxu0 %v136
    %182 = vmatpush.msra.mxu0 %v134
    %183 = vmatpush.msra.mxu0 %v132
    %184 = vmatmul.f32.gmra.mxu0 %v160
    %v185 = vpop.f32.mrf.mxu0
    %v186 = vadd.f32 %v147, %v185
    %187 = vmatmul.f32.gmra.mxu0 %v163
    %v188 = vpop.f32.mrf.mxu0
    %v189 = vadd.f32 %v152, %v188
    %190 = vmatmul.f32.gmra.mxu0 %v166
    %v191 = vpop.f32.mrf.mxu0
    %v192 = vadd.f32 %v157, %v191
    %193 = vdwg.mxu0
    %194 = vmatpush.msra.mxu0 0.0
    %195 = vmatpush.msra.mxu0 0.0
    %196 = vmatpush.msra.mxu0 0.0
    %197 = vmatpush.msra.mxu0 0.0
    %198 = vmatpush.msra.mxu0 0.0
    %199 = vmatpush.msra.mxu0 0.0
    %200 = vmatpush.msra.mxu0 0.0
    %201 = vmatpush.msra.mxu0 0.0
    %202 = vmatpush.msra.mxu0 0.0
    %203 = vmatpush.msra.mxu0 0.0
    %204 = vmatpush.msra.mxu0 0.0
    %205 = vmatpush.msra.mxu0 0.0
    %206 = vmatpush.msra.mxu0 %v139
    %207 = vmatpush.msra.mxu0 %v137
    %208 = vmatpush.msra.mxu0 %v135
    %209 = vmatpush.msra.mxu0 %v133
    %210 = vmatmul.f32.gmra.mxu0 %v160
    %v211 = vpop.f32.mrf.mxu0
    %v212 = vadd.f32 %v147, %v211
    %213 = vmatmul.f32.gmra.mxu0 %v163
    %v214 = vpop.f32.mrf.mxu0
    %v215 = vadd.f32 %v152, %v214
    %216 = vmatmul.f32.gmra.mxu0 %v166
    %v217 = vpop.f32.mrf.mxu0
    %v218 = vadd.f32 %v157, %v217
    %219 = vdwg.mxu0
    %s220 = scalar_lea.vmem %s3, 48
    %221 = vst [vmem:[%s220] sm:$0xff] %v186
    %222 = vst [vmem:[%s220 + $0x8] sm:$0xff] %v212
    %223 = vst [vmem:[%s220 + $0x10] sm:$0xff] %v189
    %224 = vst [vmem:[%s220 + $0x18] sm:$0xff] %v215
    %225 = vst [vmem:[%s220 + $0x20] sm:$0x3f] %v192
    %226 = vst [vmem:[%s220 + $0x28] sm:$0x3f] %v218
    %s227 = scalar_lea.vmem %s1, 48
    %v228 = vld [vmem:[%s227] sm:$0xff]
    %v229 = vld [vmem:[%s227 + $0x8] sm:$0xff]
    %v230 = vld [vmem:[%s227 + $0x10] sm:$0x3f]
    %s231 = scalar_lea.vmem [#allocation2], 128
    %v232 = vld [vmem:[%s231] sm:$0xff]
    %v233 = vld [vmem:[%s231 + $0x8] sm:$0xff]
    %v234 = vld [vmem:[%s231 + $0x10] sm:$0xff]
    %v235 = vld [vmem:[%s231 + $0x18] sm:$0xff]
    %v236 = vld [vmem:[%s231 + $0x20] sm:$0xff]
    %v237 = vld [vmem:[%s231 + $0x28] sm:$0xff]
    %v238 = vld [vmem:[%s231 + $0x30] sm:$0xff]
    %v239 = vld [vmem:[%s231 + $0x38] sm:$0xff]
    %s240 = scalar_lea.vmem %s2, 48
    %v241 = vld [vmem:[%s240] sm:$0xff]
    %v242 = vld [vmem:[%s240 + $0x8] sm:$0xff]
    %v243 = vld [vmem:[%s240 + $0x10] sm:$0x3f]
    %245 = vset.pattern.permute.xlu0 0
    %246 = vperm.xlu0 %245, %v241
    %v247 = vpop.permute.xlu0 %246
    %250 = vset.pattern.permute.xlu0 0
    %251 = vperm.xlu0 %250, %v242
    %v252 = vpop.permute.xlu0 %251
    %255 = vset.pattern.permute.xlu0 0
    %256 = vperm.xlu0 %255, %v243
    %v257 = vpop.permute.xlu0 %256
    %v260 = vsel %vm59, %v228, 0
    %v263 = vsel %vm59, %v229, 0
    %v266 = vsel %vm59, %v230, 0
    %268 = vmatpush.msra.mxu0 0.0
    %269 = vmatpush.msra.mxu0 0.0
    %270 = vmatpush.msra.mxu0 0.0
    %271 = vmatpush.msra.mxu0 0.0
    %272 = vmatpush.msra.mxu0 0.0
    %273 = vmatpush.msra.mxu0 0.0
    %274 = vmatpush.msra.mxu0 0.0
    %275 = vmatpush.msra.mxu0 0.0
    %276 = vmatpush.msra.mxu0 0.0
    %277 = vmatpush.msra.mxu0 0.0
    %278 = vmatpush.msra.mxu0 0.0
    %279 = vmatpush.msra.mxu0 0.0
    %280 = vmatpush.msra.mxu0 %v238
    %281 = vmatpush.msra.mxu0 %v236
    %282 = vmatpush.msra.mxu0 %v234
    %283 = vmatpush.msra.mxu0 %v232
    %284 = vmatmul.f32.gmra.mxu0 %v260
    %v285 = vpop.f32.mrf.mxu0
    %v286 = vadd.f32 %v247, %v285
    %287 = vmatmul.f32.gmra.mxu0 %v263
    %v288 = vpop.f32.mrf.mxu0
    %v289 = vadd.f32 %v252, %v288
    %290 = vmatmul.f32.gmra.mxu0 %v266
    %v291 = vpop.f32.mrf.mxu0
    %v292 = vadd.f32 %v257, %v291
    %293 = vdwg.mxu0
    %294 = vmatpush.msra.mxu0 0.0
    %295 = vmatpush.msra.mxu0 0.0
    %296 = vmatpush.msra.mxu0 0.0
    %297 = vmatpush.msra.mxu0 0.0
    %298 = vmatpush.msra.mxu0 0.0
    %299 = vmatpush.msra.mxu0 0.0
    %300 = vmatpush.msra.mxu0 0.0
    %301 = vmatpush.msra.mxu0 0.0
    %302 = vmatpush.msra.mxu0 0.0
    %303 = vmatpush.msra.mxu0 0.0
    %304 = vmatpush.msra.mxu0 0.0
    %305 = vmatpush.msra.mxu0 0.0
    %306 = vmatpush.msra.mxu0 %v239
    %307 = vmatpush.msra.mxu0 %v237
    %308 = vmatpush.msra.mxu0 %v235
    %309 = vmatpush.msra.mxu0 %v233
    %310 = vmatmul.f32.gmra.mxu0 %v260
    %v311 = vpop.f32.mrf.mxu0
    %v312 = vadd.f32 %v247, %v311
    %313 = vmatmul.f32.gmra.mxu0 %v263
    %v314 = vpop.f32.mrf.mxu0
    %v315 = vadd.f32 %v252, %v314
    %316 = vmatmul.f32.gmra.mxu0 %v266
    %v317 = vpop.f32.mrf.mxu0
    %v318 = vadd.f32 %v257, %v317
    %319 = vdwg.mxu0
    %s320 = scalar_lea.vmem %s3, 96
    %321 = vst [vmem:[%s320] sm:$0xff] %v286
    %322 = vst [vmem:[%s320 + $0x8] sm:$0xff] %v312
    %323 = vst [vmem:[%s320 + $0x10] sm:$0xff] %v289
    %324 = vst [vmem:[%s320 + $0x18] sm:$0xff] %v315
    %325 = vst [vmem:[%s320 + $0x20] sm:$0x3f] %v292
    %326 = vst [vmem:[%s320 + $0x28] sm:$0x3f] %v318
    %v327 = vld [vmem:[%s227] sm:$0xff]
    %v328 = vld [vmem:[%s227 + $0x8] sm:$0xff]
    %v329 = vld [vmem:[%s227 + $0x10] sm:$0x3f]
    %s330 = scalar_lea.vmem [#allocation2], 192
    %v331 = vld [vmem:[%s330] sm:$0xff]
    %v332 = vld [vmem:[%s330 + $0x8] sm:$0xff]
    %v333 = vld [vmem:[%s330 + $0x10] sm:$0xff]
    %v334 = vld [vmem:[%s330 + $0x18] sm:$0xff]
    %v335 = vld [vmem:[%s330 + $0x20] sm:$0xff]
    %v336 = vld [vmem:[%s330 + $0x28] sm:$0xff]
    %v337 = vld [vmem:[%s330 + $0x30] sm:$0xff]
    %v338 = vld [vmem:[%s330 + $0x38] sm:$0xff]
    %v339 = vld [vmem:[%s240] sm:$0xff]
    %v340 = vld [vmem:[%s240 + $0x8] sm:$0xff]
    %v341 = vld [vmem:[%s240 + $0x10] sm:$0x3f]
    %343 = vset.pattern.permute.xlu0 0
    %344 = vperm.xlu0 %343, %v339
    %v345 = vpop.permute.xlu0 %344
    %348 = vset.pattern.permute.xlu0 0
    %349 = vperm.xlu0 %348, %v340
    %v350 = vpop.permute.xlu0 %349
    %353 = vset.pattern.permute.xlu0 0
    %354 = vperm.xlu0 %353, %v341
    %v355 = vpop.permute.xlu0 %354
    %v358 = vsel %vm59, %v327, 0
    %v361 = vsel %vm59, %v328, 0
    %v364 = vsel %vm59, %v329, 0
    %366 = vmatpush.msra.mxu0 0.0
    %367 = vmatpush.msra.mxu0 0.0
    %368 = vmatpush.msra.mxu0 0.0
    %369 = vmatpush.msra.mxu0 0.0
    %370 = vmatpush.msra.mxu0 0.0
    %371 = vmatpush.msra.mxu0 0.0
    %372 = vmatpush.msra.mxu0 0.0
    %373 = vmatpush.msra.mxu0 0.0
    %374 = vmatpush.msra.mxu0 0.0
    %375 = vmatpush.msra.mxu0 0.0
    %376 = vmatpush.msra.mxu0 0.0
    %377 = vmatpush.msra.mxu0 0.0
    %378 = vmatpush.msra.mxu0 %v337
    %379 = vmatpush.msra.mxu0 %v335
    %380 = vmatpush.msra.mxu0 %v333
    %381 = vmatpush.msra.mxu0 %v331
    %382 = vmatmul.f32.gmra.mxu0 %v358
    %v383 = vpop.f32.mrf.mxu0
    %v384 = vadd.f32 %v345, %v383
    %385 = vmatmul.f32.gmra.mxu0 %v361
    %v386 = vpop.f32.mrf.mxu0
    %v387 = vadd.f32 %v350, %v386
    %388 = vmatmul.f32.gmra.mxu0 %v364
    %v389 = vpop.f32.mrf.mxu0
    %v390 = vadd.f32 %v355, %v389
    %391 = vdwg.mxu0
    %392 = vmatpush.msra.mxu0 0.0
    %393 = vmatpush.msra.mxu0 0.0
    %394 = vmatpush.msra.mxu0 0.0
    %395 = vmatpush.msra.mxu0 0.0
    %396 = vmatpush.msra.mxu0 0.0
    %397 = vmatpush.msra.mxu0 0.0
    %398 = vmatpush.msra.mxu0 0.0
    %399 = vmatpush.msra.mxu0 0.0
    %400 = vmatpush.msra.mxu0 0.0
    %401 = vmatpush.msra.mxu0 0.0
    %402 = vmatpush.msra.mxu0 0.0
    %403 = vmatpush.msra.mxu0 0.0
    %404 = vmatpush.msra.mxu0 %v338
    %405 = vmatpush.msra.mxu0 %v336
    %406 = vmatpush.msra.mxu0 %v334
    %407 = vmatpush.msra.mxu0 %v332
    %408 = vmatmul.f32.gmra.mxu0 %v358
    %v409 = vpop.f32.mrf.mxu0
    %v410 = vadd.f32 %v345, %v409
    %411 = vmatmul.f32.gmra.mxu0 %v361
    %v412 = vpop.f32.mrf.mxu0
    %v413 = vadd.f32 %v350, %v412
    %414 = vmatmul.f32.gmra.mxu0 %v364
    %v415 = vpop.f32.mrf.mxu0
    %v416 = vadd.f32 %v355, %v415
    %417 = vdwg.mxu0
    %s418 = scalar_lea.vmem %s3, 144
    %419 = vst [vmem:[%s418] sm:$0xff] %v384
    %420 = vst [vmem:[%s418 + $0x8] sm:$0xff] %v410
    %421 = vst [vmem:[%s418 + $0x10] sm:$0xff] %v387
    %422 = vst [vmem:[%s418 + $0x18] sm:$0xff] %v413
    %423 = vst [vmem:[%s418 + $0x20] sm:$0x3f] %v390
    %424 = vst [vmem:[%s418 + $0x28] sm:$0x3f] %v416
    // Predicated region
    $region18: #{tpu_custom_call.1} parent=1 // pred_check
      _
    $region19: #{tpu_custom_call.1} parent=1 // pred_check_branch
      %426 = sbr.rel (0) target = $region21
    $region20: #{tpu_custom_call.1} parent=1 // pred_region
      _
    $region21: #{tpu_custom_call.1} parent=1 // pred_fallthru
      _
    // Predicated region
    $region22: #{tpu_custom_call.1} parent=1 // pred_check
      _
    $region23: #{tpu_custom_call.1} parent=1 // pred_check_branch
      %428 = sbr.rel (0) target = $region25
    $region24: #{tpu_custom_call.1} parent=1 // pred_region
      _
    $region25: #{tpu_custom_call.1} parent=1 // pred_fallthru
      _
    %429 = vsyncpa [#allocation3], 1

</llo_original>
